<compile_context>
chip_gen: v7x
topology: tpu7x:2x2x1
jax: 0.10.0
libtpu: 0.0.40
codegen_flags: <defaults>
</compile_context>

<pallas_src>
import functools

import jax
import jax.numpy as jnp
from jax.experimental import pallas as pl
from jax.experimental.pallas import tpu as pltpu


def _round_up(x: int, m: int) -> int:
    return ((x + m - 1) // m) * m


def _cls_head_kernel(x_ref, bits_ref, w_ref, b_ref, o_ref, *, training: bool, p: float):
    """One (TM, H) tile of gathered <mask> rows -> dropout -> linear head.

    Refs (per grid step i):
      x_ref    : VMEM (TM, H)   float32  -- gathered hidden states at the <mask> position
      bits_ref : VMEM (TM, H)   uint32   -- dropout random bits (unused when training=False)
      w_ref    : VMEM (H, Cp)   float32  -- linear weight (transposed vs. torch, lane-padded)
      b_ref    : VMEM (1, Cp)   float32  -- linear bias (lane-padded)
      o_ref    : VMEM (TM, Cp)  float32  -- output logits tile
    """
    x = x_ref[...]                                           # (TM, H)

    if training:
        # nn.Dropout(p): keep with prob (1-p), scale kept values by 1/(1-p).
        threshold = jnp.uint32(int((1.0 - p) * (2 ** 32 - 1)))
        keep = bits_ref[...] < threshold
        x = jnp.where(keep, x * (1.0 / (1.0 - p)), jnp.zeros_like(x))

    # self.linear: (TM, H) @ (H, Cp) + (1, Cp)  -- single batched MXU matmul per tile.
    logits = jnp.dot(x, w_ref[...], preferred_element_type=jnp.float32) + b_ref[...]
    o_ref[...] = logits.astype(o_ref.dtype)


def codeprompt_classification_forward(hidden_states, loss_ids, weight_t, bias, *,
                                      seed: int = 0, training: bool = True):
    """JAX wrapper reproducing CodePromptClassificationEx.forward (1 mask token / example).

    hidden_states : (B, S, H) float32  -- prompt_model(...).hidden_states[-1]
    loss_ids      : (B, S)    int32    -- batch['loss_ids'], exactly one position > 0 per row
    weight_t      : (H, C)    float32  -- nn.Linear weight, transposed
    bias          : (C,)      float32  -- nn.Linear bias
    returns       : (B, C)    float32  -- logits
    """
    B, S, H = hidden_states.shape
    C = weight_t.shape[1]

    # extract_at_mask (single <mask> per row): gather in the wrapper so the kernel only ever
    # touches B*H floats of hidden state.
    # Note: argmax returns 0 for a row with no mask token (the PyTorch version would raise).
    mask_pos = jnp.argmax(loss_ids > 0, axis=1)
    x = jnp.take_along_axis(hidden_states, mask_pos[:, None, None], axis=1)[:, 0, :]   # (B, H)
    x = x.astype(jnp.float32)

    # Tile/pad geometry: TM rows per grid step (sublane-aligned), classes padded to lane width.
    TM = 128 if B >= 128 else _round_up(B, 8)
    Bp = _round_up(B, TM)
    Cp = _round_up(C, 128)

    x_p = jnp.zeros((Bp, H), jnp.float32).at[:B, :].set(x)
    w_p = jnp.zeros((H, Cp), jnp.float32).at[:, :C].set(weight_t.astype(jnp.float32))
    b_p = jnp.zeros((1, Cp), jnp.float32).at[0, :C].set(bias.astype(jnp.float32))

    # Dropout bits generated once for the whole padded batch (deterministic given `seed`).
    bits = jax.random.bits(jax.random.PRNGKey(seed), (Bp, H), dtype=jnp.uint32)

    kernel = functools.partial(_cls_head_kernel, training=training, p=0.5)

    out = pl.pallas_call(
        kernel,
        out_shape=jax.ShapeDtypeStruct((Bp, Cp), jnp.float32),
        grid=(Bp // TM,),
        in_specs=[
            pl.BlockSpec((TM, H), lambda i: (i, 0)),   # gathered rows, tiled over batch
            pl.BlockSpec((TM, H), lambda i: (i, 0)),   # dropout bits, tiled over batch
            pl.BlockSpec((H, Cp), lambda i: (0, 0)),   # shared weight
            pl.BlockSpec((1, Cp), lambda i: (0, 0)),   # shared bias
        ],
        out_specs=pl.BlockSpec((TM, Cp), lambda i: (i, 0)),
        compiler_params=pltpu.CompilerParams(
            dimension_semantics=("parallel",),         # tiles independent -> megacore on v7x
        ),
    )(x_p, bits, w_p, b_p)

    return out[:B, :C]


if __name__ == "__main__":
    # Small, self-consistent shapes: batch=2, seq=8, hidden=32, num_classes=4.
    B, S, H, C = 2, 8, 32, 4

    key = jax.random.PRNGKey(0)
    k_h, k_w, k_b = jax.random.split(key, 3)

    # Synthetic "last hidden state" of the PLM.
    hidden_states = jax.random.normal(k_h, (B, S, H), dtype=jnp.float32)

    # loss_ids: exactly one <mask> token per example (positions 3 and 5).
    loss_ids = jnp.zeros((B, S), dtype=jnp.int32)
    loss_ids = loss_ids.at[0, 3].set(1).at[1, 5].set(1)

    # Deterministic nn.Linear(H, C) init: U(-1/sqrt(H), 1/sqrt(H)); stored transposed (H, C).
    bound = 1.0 / (H ** 0.5)
    weight_t = jax.random.uniform(k_w, (H, C), jnp.float32, minval=-bound, maxval=bound)
    bias = jax.random.uniform(k_b, (C,), jnp.float32, minval=-bound, maxval=bound)

    mask_pos = jnp.argmax(loss_ids > 0, axis=1)
    x_gathered = hidden_states[jnp.arange(B), mask_pos]                 # extract_at_mask, (B, H)

    # --- eval mode (dropout = identity): check against a pure-JAX reference ---
    logits_eval = codeprompt_classification_forward(
        hidden_states, loss_ids, weight_t, bias, seed=0, training=False)
    jax.block_until_ready(logits_eval)

    ref_eval = x_gathered @ weight_t + bias
    assert logits_eval.shape == (B, C)
    assert jnp.allclose(logits_eval, ref_eval, atol=1e-5, rtol=1e-5), "eval-mode mismatch vs reference"

    # --- train mode (dropout p=0.5, deterministic given seed): check vs an equivalent reference ---
    seed = 1234
    logits_train = codeprompt_classification_forward(
        hidden_states, loss_ids, weight_t, bias, seed=seed, training=True)
    jax.block_until_ready(logits_train)
    assert logits_train.shape == (B, C)

    TM = _round_up(B, 8)
    Bp = _round_up(B, TM)
    bits_ref = jax.random.bits(jax.random.PRNGKey(seed), (Bp, H), dtype=jnp.uint32)[:B]
    keep = bits_ref < jnp.uint32(int(0.5 * (2 ** 32 - 1)))
    x_drop = jnp.where(keep, x_gathered * 2.0, 0.0)
    ref_train = x_drop @ weight_t + bias
    assert jnp.allclose(logits_train, ref_train, atol=1e-5, rtol=1e-5), "train-mode mismatch vs reference"

    print("KERNEL_OK")
</pallas_src>

<mosaic_0001>
module attributes {stable_mosaic.version = 11 : i64} {
  func.func @_cls_head_kernel(%arg0: i32, %arg1: memref<8x32xf32, #tpu.memory_space<vmem>>, %arg2: memref<8x32xi32, #tpu.memory_space<vmem>>, %arg3: memref<32x128xf32, #tpu.memory_space<vmem>>, %arg4: memref<1x128xf32, #tpu.memory_space<vmem>>, %arg5: memref<8x128xf32, #tpu.memory_space<vmem>>) attributes {dimension_semantics = [#tpu.dimension_semantics<parallel>], iteration_bounds = array<i64: 1>, scalar_prefetch = 0 : i64, scratch_operands = 0 : i64, tpu.core_type = #tpu.core_type<tc>, window_params = [{transform_indices = @transform_0, window_bounds = array<i64: 8, 32>}, {transform_indices = @transform_1, window_bounds = array<i64: 8, 32>}, {pipeline_mode = #tpu.pipeline_mode<synchronous>, transform_indices = @transform_2, window_bounds = array<i64: 32, 128>}, {pipeline_mode = #tpu.pipeline_mode<synchronous>, transform_indices = @transform_3, window_bounds = array<i64: 1, 128>}, {transform_indices = @transform_4, window_bounds = array<i64: 8, 128>}]} {
    %c0 = arith.constant 0 : index
    %c0_0 = arith.constant 0 : index
    %0 = vector.load %arg1[%c0, %c0_0] : memref<8x32xf32, #tpu.memory_space<vmem>>, vector<8x32xf32>
    %c0_1 = arith.constant 0 : index
    %c0_2 = arith.constant 0 : index
    %1 = vector.load %arg3[%c0_1, %c0_2] : memref<32x128xf32, #tpu.memory_space<vmem>>, vector<32x128xf32>
    %cst = arith.constant dense<0.000000e+00> : vector<8x128xf32>
    %2 = tpu.matmul %0, %1, %cst {dimension_numbers = #tpu.dot_dimension_numbers<[1], [0], [0], [1], [0, 0, 1, 1], [], []>} : vector<8x32xf32>, vector<32x128xf32>, vector<8x128xf32> -> vector<8x128xf32>
    %c0_3 = arith.constant 0 : index
    %c0_4 = arith.constant 0 : index
    %3 = vector.load %arg4[%c0_3, %c0_4] : memref<1x128xf32, #tpu.memory_space<vmem>>, vector<1x128xf32>
    %4 = vector.broadcast %3 : vector<1x128xf32> to vector<8x128xf32>
    %5 = arith.addf %2, %4 : vector<8x128xf32>
    %c0_5 = arith.constant 0 : index
    %c0_6 = arith.constant 0 : index
    %6 = vector.load %arg5[%c0_5, %c0_6] : memref<8x128xf32, #tpu.memory_space<vmem>>, vector<8x128xf32>
    tpu.vector_store %arg5[%c0_5, %c0_6], %5 {strides = array<i32>} : memref<8x128xf32, #tpu.memory_space<vmem>>, vector<8x128xf32>,
    return
  }
  func.func @transform_0(%arg0: i32) -> (i32, i32) {
    %c0_i32 = arith.constant 0 : i32
    %c0_i32_0 = arith.constant 0 : i32
    return %arg0, %c0_i32 : i32, i32
  }
  func.func @transform_1(%arg0: i32) -> (i32, i32) {
    %c0_i32 = arith.constant 0 : i32
    %c0_i32_0 = arith.constant 0 : i32
    return %arg0, %c0_i32 : i32, i32
  }
  func.func @transform_2(%arg0: i32) -> (i32, i32) {
    %c0_i32 = arith.constant 0 : i32
    %c0_i32_0 = arith.constant 0 : i32
    %c0_i32_1 = arith.constant 0 : i32
    return %c0_i32, %c0_i32_0 : i32, i32
  }
  func.func @transform_3(%arg0: i32) -> (i32, i32) {
    %c0_i32 = arith.constant 0 : i32
    %c0_i32_0 = arith.constant 0 : i32
    %c0_i32_1 = arith.constant 0 : i32
    return %c0_i32, %c0_i32_0 : i32, i32
  }
  func.func @transform_4(%arg0: i32) -> (i32, i32) {
    %c0_i32 = arith.constant 0 : i32
    %c0_i32_0 = arith.constant 0 : i32
    return %arg0, %c0_i32 : i32, i32
  }
}

</mosaic_0001>

<llo_original>
// kernel: tpu_custom_call.1
$region0: #{tpu_custom_call.1}
  #allocation0 [shape = 'u32[]', space=smem, size = 0x4, offset = 0x4, fixed_abs, tag = 'smem constant byte address 0x4 - core index']
  #allocation1 [shape = 'u32[144,128]{1,0:T(1,128)}', space=vmem, size = 0x12000, scoped, tag = 'internal scratch']
  %s0 = inlined_call_operand.hbm [shape: f32[8,32], index: 0, kind: input, shape index: {}]
  %s1 = inlined_call_operand.hbm [shape: u32[8,32], index: 1, kind: input, shape index: {}]
  %s2 = inlined_call_operand.hbm [shape: f32[32,128], index: 2, kind: input, shape index: {}]
  %s3 = inlined_call_operand.vmem [shape: f32[1,128], index: 3, kind: input, shape index: {}]
  %s4 = inlined_call_operand.hbm [shape: f32[8,128], index: 4, kind: output, shape index: {}]
  %s5 = sld [smem:[#allocation0]]
  $region38: #{tpu_custom_call.1} parent=0
    _
  %s7 = ssub.s32 1, %s5
  %s8 = scalar_select 0, %s7, %s5
  $region1: #{tpu_custom_call.1} parent=0
    #allocation2 [shape = 'u8[4096]{0}', space=vmem, size = 0x1000, scoped, tag = 'input window, operand 0, single buffered']
    #allocation3 [shape = 's32[1]{0}', space=sflag, size = 0x4, scoped, tag = 'scoped memory for tpu_custom_call.1']
    #allocation4 [shape = 's32[1]{0}', space=sflag, size = 0x4, scoped, tag = 'scoped memory for tpu_custom_call.1']
    #allocation5 [shape = 'u8[4096]{0}', space=vmem, size = 0x1000, scoped, tag = 'input window, operand 1, single buffered']
    #allocation6 [shape = 's32[1]{0}', space=sflag, size = 0x4, scoped, tag = 'scoped memory for tpu_custom_call.1']
    #allocation7 [shape = 'u8[16384]{0}', space=vmem, size = 0x4000, scoped, tag = 'input window, operand 2, single buffered']
    #allocation8 [shape = 'u8[4096]{0}', space=vmem, size = 0x1000, scoped, tag = 'output window, operand 0, single buffered']
    %9 = vsyncpa [#allocation3], 0
    %10 = vsyncpa [#allocation6], 0
    %11 = vsyncpa [#allocation4], 0
    // Predicated region
    $region2: #{tpu_custom_call.1} parent=1 // pred_check
      _
    $region3: #{tpu_custom_call.1} parent=1 // pred_check_branch
      %13 = sbr.rel (0) target = $region5
    $region4: #{tpu_custom_call.1} parent=1 // pred_region
      %s15 = ssub.s32 128, 128
      %16 = vsyncadd [#allocation3], %s15
      %s18 = sshll.u32 [#allocation2], 4
      %s19 = int_to_ptr.vmem [resolvable:$true] %s18
      %21 = dma.hbm_to_vmem [thread:$0]  %s0, 128, %s19, [#allocation3]
    $region5: #{tpu_custom_call.1} parent=1 // pred_fallthru
      _
    // Predicated region
    $region6: #{tpu_custom_call.1} parent=1 // pred_check
      _
    $region7: #{tpu_custom_call.1} parent=1 // pred_check_branch
      %23 = sbr.rel (0) target = $region9
    $region8: #{tpu_custom_call.1} parent=1 // pred_region
      %s25 = ssub.s32 128, 128
      %26 = vsyncadd [#allocation6], %s25
      %s28 = sshll.u32 [#allocation5], 4
      %s29 = int_to_ptr.vmem [resolvable:$true] %s28
      %31 = dma.hbm_to_vmem [thread:$0]  %s1, 128, %s29, [#allocation6]
    $region9: #{tpu_custom_call.1} parent=1 // pred_fallthru
      _
    // Predicated region
    $region10: #{tpu_custom_call.1} parent=1 // pred_check
      _
    $region11: #{tpu_custom_call.1} parent=1 // pred_check_branch
      %33 = sbr.rel (0) target = $region13
    $region12: #{tpu_custom_call.1} parent=1 // pred_region
      %s35 = ssub.s32 512, 512
      %36 = vsyncadd [#allocation6], %s35
      %s37 = sshll.u32 [#allocation7], 4
      %s38 = int_to_ptr.vmem [resolvable:$true] %s37
      %43 = dma.hbm_to_vmem [thread:$0]  %s2, 512, %s38, [#allocation6], 128, 128, 8
    $region13: #{tpu_custom_call.1} parent=1 // pred_fallthru
      _
    // Predicated region
    $region14: #{tpu_custom_call.1} parent=1 // pred_check
      _
    $region15: #{tpu_custom_call.1} parent=1 // pred_check_branch
      %45 = sbr.rel (0) target = $region17
    $region16: #{tpu_custom_call.1} parent=1 // pred_region
      _
    $region17: #{tpu_custom_call.1} parent=1 // pred_fallthru
      _
    // Predicated region
    $region18: #{tpu_custom_call.1} parent=1 // pred_check
      _
    $region19: #{tpu_custom_call.1} parent=1 // pred_check_branch
      %47 = sbr.rel (0) target = $region21
    $region20: #{tpu_custom_call.1} parent=1 // pred_region
      %48 = dma.done [#allocation3], 128
    $region21: #{tpu_custom_call.1} parent=1 // pred_fallthru
      _
    // Predicated region
    $region22: #{tpu_custom_call.1} parent=1 // pred_check
      _
    $region23: #{tpu_custom_call.1} parent=1 // pred_check_branch
      %50 = sbr.rel (0) target = $region25
    $region24: #{tpu_custom_call.1} parent=1 // pred_region
      %51 = dma.done [#allocation6], 128
    $region25: #{tpu_custom_call.1} parent=1 // pred_fallthru
      _
    // Predicated region
    $region26: #{tpu_custom_call.1} parent=1 // pred_check
      _
    $region27: #{tpu_custom_call.1} parent=1 // pred_check_branch
      %53 = sbr.rel (0) target = $region29
    $region28: #{tpu_custom_call.1} parent=1 // pred_region
      %54 = dma.done [#allocation6], 512
    $region29: #{tpu_custom_call.1} parent=1 // pred_fallthru
      _
    %v55 = vld [vmem:[#allocation2] sm:$0xff]
    %v56 = vld [vmem:[#allocation7] sm:$0xff]
    %v57 = vld [vmem:[#allocation7 + $0x8] sm:$0xff]
    %v58 = vld [vmem:[#allocation7 + $0x10] sm:$0xff]
    %v59 = vld [vmem:[#allocation7 + $0x18] sm:$0xff]
    %v60 = vld [vmem:[%s3] sm:$0x1]
    %v62 = vlaneseq
    %v63 = vshrl.u32 %v62, 7
    %v64 = vsub.s32 0, %v63
    %v65 = vrot.slane %v60, %v64
    %vm67 = vcmask 261120
    %v69 = vsel %vm67, %v55, 0
    %71 = vmatprep.subr.mxu0 0.0
    %72 = vmatpush1.msra.mxu0 %v56
    %73 = vmatprep.subr.mxu0 0.0
    %74 = vmatpush1.msra.mxu0 %v57
    %75 = vmatprep.subr.mxu0 0.0
    %76 = vmatpush1.msra.mxu0 %v58
    %77 = vmatprep.subr.mxu0 0.0
    %78 = vmatpush1.msra.mxu0 %v59
    %79 = vmatprep.subr.mxu0 0.0
    %80 = vmatpush1.msra.mxu0 0.0
    %81 = vmatprep.subr.mxu0 0.0
    %82 = vmatpush1.msra.mxu0 0.0
    %83 = vmatprep.subr.mxu0 0.0
    %84 = vmatpush1.msra.mxu0 0.0
    %85 = vmatprep.subr.mxu0 0.0
    %86 = vmatpush1.msra.mxu0 0.0
    %87 = vmatprep.subr.mxu0 0.0
    %88 = vmatpush1.msra.mxu0 0.0
    %89 = vmatprep.subr.mxu0 0.0
    %90 = vmatpush1.msra.mxu0 0.0
    %91 = vmatprep.subr.mxu0 0.0
    %92 = vmatpush1.msra.mxu0 0.0
    %93 = vmatprep.subr.mxu0 0.0
    %94 = vmatpush1.msra.mxu0 0.0
    %95 = vmatprep.subr.mxu0 0.0
    %96 = vmatpush1.msra.mxu0 0.0
    %97 = vmatprep.subr.mxu0 0.0
    %98 = vmatpush1.msra.mxu0 0.0
    %99 = vmatprep.subr.mxu0 0.0
    %100 = vmatpush1.msra.mxu0 0.0
    %101 = vmatprep.subr.mxu0 0.0
    %102 = vmatpush1.msra.mxu0 0.0
    %103 = vmatprep.subr.mxu0 0.0
    %104 = vmatpush1.msra.mxu0 0.0
    %105 = vmatprep.subr.mxu0 0.0
    %106 = vmatpush1.msra.mxu0 0.0
    %107 = vmatprep.subr.mxu0 0.0
    %108 = vmatpush1.msra.mxu0 0.0
    %109 = vmatprep.subr.mxu0 0.0
    %110 = vmatpush1.msra.mxu0 0.0
    %111 = vmatprep.subr.mxu0 0.0
    %112 = vmatpush1.msra.mxu0 0.0
    %113 = vmatprep.subr.mxu0 0.0
    %114 = vmatpush1.msra.mxu0 0.0
    %115 = vmatprep.subr.mxu0 0.0
    %116 = vmatpush1.msra.mxu0 0.0
    %117 = vmatprep.subr.mxu0 0.0
    %118 = vmatpush1.msra.mxu0 0.0
    %119 = vmatprep.subr.mxu0 0.0
    %120 = vmatpush1.msra.mxu0 0.0
    %121 = vmatprep.subr.mxu0 0.0
    %122 = vmatpush1.msra.mxu0 0.0
    %123 = vmatprep.subr.mxu0 0.0
    %124 = vmatpush1.msra.mxu0 0.0
    %125 = vmatprep.subr.mxu0 0.0
    %126 = vmatpush1.msra.mxu0 0.0
    %127 = vmatprep.subr.mxu0 0.0
    %128 = vmatpush1.msra.mxu0 0.0
    %129 = vmatprep.subr.mxu0 0.0
    %130 = vmatpush1.msra.mxu0 0.0
    %131 = vmatprep.subr.mxu0 0.0
    %132 = vmatpush1.msra.mxu0 0.0
    %133 = vmatprep.subr.mxu0 0.0
    %134 = vmatpush1.msra.mxu0 0.0
    %135 = vmatprep.mubr.f32.mxu0 0.0
    %136 = vmatmul.mubr.f32.gmra.mrb[0].mxu0 %v69
    %v137 = vpop.f32.mrb[0].mxu0
    %v138 = vadd.f32 %v65, %v137
    %v139 = vpop.f32.mrb[0].mxu0
    %140 = vdwg.mxu0
    %141 = vst [vmem:[#allocation8] sm:$0xff] %v138
    // Predicated region
    $region30: #{tpu_custom_call.1} parent=1 // pred_check
      _
    $region31: #{tpu_custom_call.1} parent=1 // pred_check_branch
      %143 = sbr.rel (0) target = $region33
    $region32: #{tpu_custom_call.1} parent=1 // pred_region
      %s145 = ssub.s32 128, 128
      %146 = vsyncadd [#allocation4], %s145
      %s148 = sshll.u32 [#allocation8], 4
      %s149 = int_to_ptr.vmem [resolvable:$true] %s148
      %151 = dma.vmem_to_hbm [thread:$0]  %s149, 128, %s4, [#allocation4]
    $region33: #{tpu_custom_call.1} parent=1 // pred_fallthru
      _
    // Predicated region
    $region34: #{tpu_custom_call.1} parent=1 // pred_check
      _
    $region35: #{tpu_custom_call.1} parent=1 // pred_check_branch
      %153 = sbr.rel (0) target = $region37
    $region36: #{tpu_custom_call.1} parent=1 // pred_region
      %154 = dma.done [#allocation4], 128
    $region37: #{tpu_custom_call.1} parent=1 // pred_fallthru
      _
    %155 = vsyncpa [#allocation3], 1
    %156 = vsyncpa [#allocation6], 1
    %157 = vsyncpa [#allocation4], 1

</llo_original>
